<compile_context>
chip_gen: v6e
topology: v6e:2x2x1
jax: 0.10.0
libtpu: 0.0.40
codegen_flags: <defaults>
</compile_context>

<pallas_src>
import functools

import jax
import jax.numpy as jnp
from jax.experimental import pallas as pl
from jax.experimental.pallas import tpu as pltpu

NUM_CLASSES = 6                      # num_classes[0]
IMG_W = 8                            # self.image_weight
TXT_W = 4                            # self.text_weight
IMG_FEATS = NUM_CLASSES * IMG_W      # 48
TXT_FEATS = NUM_CLASSES * TXT_W      # 24
CAT_FEATS = IMG_FEATS + TXT_FEATS    # 72
HID_FEATS = CAT_FEATS // 2           # 36
TXT_DIM = 768
STEM_C = 24                          # stand-in stem channels
K_RAW = 27                           # 3x3x3 im2col contraction
K_PAD = 32                           # padded, sublane friendly


# ---------------- fully fused kernel (stem + GAP + folded heads) ----------------
def fused_kernel(p_ref, ws_ref, bs_ref,
                 xt_ref, wif_ref, wtf_ref, bf_ref, wf2_ref, bf2_ref,
                 o_ref, acc_ref, *, total_cols, pad_cols):
    s = pl.program_id(1)

    @pl.when(s == 0)
    def _init():
        acc_ref[...] = jnp.zeros_like(acc_ref)

    # Lane-dense stem tile: relu(W^T @ P + b).  bf16 operands, f32 accumulation (MXU).
    x = jnp.dot(ws_ref[...], p_ref[...], preferred_element_type=jnp.float32)  # [24, ts]
    x = jnp.maximum(x + bs_ref[...], 0.0)                                     # bias bcast over lanes

    # Fused global-average-pool partial sum: cross-lane reduce (XLU slot), f32.
    acc_ref[...] += jnp.sum(x, axis=1, keepdims=True)                         # [24, 1]

    @pl.when(s == pl.num_programs(1) - 1)
    def _finalize():
        feat = acc_ref[...]
        if pad_cols:  # static: zero-padded spatial columns each contributed relu(b_stem)
            feat = feat - float(pad_cols) * jnp.maximum(bs_ref[...], 0.0)
        feat = feat * (1.0 / total_cols)                                      # GAP -> [24, 1]
        # Branch heads folded into fin_classifier1 (precomputed, transposed weights).
        h = (jnp.dot(wif_ref[...], feat, preferred_element_type=jnp.float32)
             + jnp.dot(wtf_ref[...], xt_ref[...], preferred_element_type=jnp.float32)
             + bf_ref[...])                                                   # [36, 1]
        h = jnp.maximum(h, 0.0)                                               # relu (dropout = identity)
        o_ref[...] = (jnp.dot(wf2_ref[...], h, preferred_element_type=jnp.float32)
                      + bf2_ref[...])                                         # [6, 1]


# ------------------------------------ wrapper ------------------------------------
def _im2col_rows(x_nhwc):
    """3x3 / stride-2 / pad-1 patches -> [B, Ho*Wo, 9*C]."""
    B, H, W, C = x_nhwc.shape
    Ho, Wo = (H + 1) // 2, (W + 1) // 2
    xp = jnp.pad(x_nhwc, ((0, 0), (1, 1), (1, 1), (0, 0)))
    cols = [xp[:, di:di + 2 * Ho:2, dj:dj + 2 * Wo:2, :]
            for di in range(3) for dj in range(3)]
    return jnp.concatenate(cols, axis=-1).reshape(B, Ho * Wo, 9 * C)


def _im2col_lane_dense(x_nhwc, s_pad):
    """Lane-dense patches: [B, K_PAD, s_pad] (K on sublanes, spatial on lanes)."""
    p = _im2col_rows(x_nhwc)                                    # [B, S, 27]
    B, S, K = p.shape
    p = jnp.pad(p, ((0, 0), (0, s_pad - S), (0, K_PAD - K)))    # zero-pad K and spatial
    return jnp.transpose(p, (0, 2, 1))                          # [B, 32, s_pad]


def _spatial_tile(s_total, target):
    """Tile size in spatial (lane) positions: multiple of 128, >= 128."""
    t = min(int(target), int(s_total))
    return max(128, ((t + 127) // 128) * 128)


def _full_spec(arr):
    zeros = (0,) * arr.ndim
    return pl.BlockSpec(arr.shape, lambda b, s, _z=zeros: _z)


def prepare_params(p):
    """Fold branch heads into the classifier; transpose to column/lane-dense layouts."""
    w_f1_img = p["w_f1"][:IMG_FEATS]                                   # [48, 36]
    w_f1_txt = p["w_f1"][IMG_FEATS:]                                   # [24, 36]
    w_stem_pad = jnp.pad(p["w_stem"], ((0, K_PAD - K_RAW), (0, 0)))    # [32, 24]
    return {
        "w_stem_t": w_stem_pad.T.astype(jnp.bfloat16),                 # [24, 32] bf16
        "b_stem_c": p["b_stem"].reshape(STEM_C, 1),                    # [24, 1]  f32
        "w_if_t": (p["w_head"] @ w_f1_img).T,                          # [36, 24] f32
        # Kept f32 (not bf16) so the strict f32 nn.Linear reference check holds;
        # it is a tiny one-time resident buffer (~110 KiB).
        "w_tf_t": (p["w_txt"] @ w_f1_txt).T,                           # [36, 768] f32
        "b_f1_c": (p["b_head"] @ w_f1_img + p["b_txt"] @ w_f1_txt
                   + p["b_f1"]).reshape(HID_FEATS, 1),                 # [36, 1]
        "w_f2_t": p["w_f2"].T,                                         # [6, 36]
        "b_f2_c": p["b_f2"].reshape(NUM_CLASSES, 1),                   # [6, 1]
    }


def hln_cat1_forward(prep, x_img_nchw, x_txt, *, spatial_tile=16384):
    x_nhwc = jnp.transpose(x_img_nchw, (0, 2, 3, 1)).astype(jnp.bfloat16)   # NCHW -> NHWC, bf16
    B, H, W, _ = x_nhwc.shape
    S = ((H + 1) // 2) * ((W + 1) // 2)

    ts = _spatial_tile(S, spatial_tile)            # lane-dense tile: ts * 64 B per buffer
    n_s = pl.cdiv(S, ts)
    s_pad = n_s * ts
    patches_t = _im2col_lane_dense(x_nhwc, s_pad)                           # [B, 32, s_pad] bf16
    xt_col = x_txt.astype(jnp.float32).reshape(B, TXT_DIM, 1)               # [B, 768, 1]

    kernel = functools.partial(fused_kernel, total_cols=S, pad_cols=s_pad - S)
    n_inputs = 9
    out = pl.pallas_call(
        kernel,
        out_shape=jax.ShapeDtypeStruct((B, NUM_CLASSES, 1), jnp.float32),
        grid_spec=pltpu.PrefetchScalarGridSpec(
            num_scalar_prefetch=0,
            grid=(B, n_s),                                                  # reduction axis last
            in_specs=[
                pl.BlockSpec((None, K_PAD, ts), lambda b, s: (b, 0, s)),    # lane-dense patch tile
                _full_spec(prep["w_stem_t"]),                               # resident weights
                _full_spec(prep["b_stem_c"]),
                pl.BlockSpec((None, TXT_DIM, 1), lambda b, s: (b, 0, 0)),   # x_txt column
                _full_spec(prep["w_if_t"]),
                _full_spec(prep["w_tf_t"]),
                _full_spec(prep["b_f1_c"]),
                _full_spec(prep["w_f2_t"]),
                _full_spec(prep["b_f2_c"]),
            ],
            out_specs=pl.BlockSpec((None, NUM_CLASSES, 1), lambda b, s: (b, 0, 0)),
            scratch_shapes=[pltpu.VMEM((STEM_C, 1), jnp.float32)],          # GAP accumulator
        ),
        compiler_params=pltpu.CompilerParams(
            dimension_semantics=("parallel", "arbitrary"),                  # megacore batch axis
            vmem_limit_bytes=32 * 1024 * 1024,                              # lane-dense tiles use <<32 MiB
            # Let XLA fuse the im2col producer into the patches input stream so the
            # [B, 32, S] patch tensor does not round-trip through HBM.
            allow_input_fusion=[True] + [False] * (n_inputs - 1),
        ),
    )(patches_t, prep["w_stem_t"], prep["b_stem_c"], xt_col,
      prep["w_if_t"], prep["w_tf_t"], prep["b_f1_c"], prep["w_f2_t"], prep["b_f2_c"])
    return out.reshape(B, NUM_CLASSES)


# ------------------------------ pure-JAX reference ------------------------------
def reference_forward(params, x_img_nchw, x_txt):
    x_nhwc = jnp.transpose(x_img_nchw, (0, 2, 3, 1)).astype(jnp.bfloat16)
    patches = _im2col_rows(x_nhwc)                                          # [B, S, 27]
    w_stem = params["w_stem"].astype(jnp.bfloat16)
    stem = jnp.maximum(
        jnp.dot(patches, w_stem, preferred_element_type=jnp.float32) + params["b_stem"], 0.0)
    feat = stem.mean(axis=1)                                                # GAP -> [B, 24]
    x_i = feat @ params["w_head"] + params["b_head"]
    x_t = x_txt @ params["w_txt"] + params["b_txt"]
    cat = jnp.concatenate([x_i, x_t], axis=1)
    h = jnp.maximum(cat @ params["w_f1"] + params["b_f1"], 0.0)
    return h @ params["w_f2"] + params["b_f2"]


def init_params(key):
    def lin(k, fan_in, fan_out):
        kw, kb = jax.random.split(k)
        bound = 1.0 / jnp.sqrt(jnp.float32(fan_in))
        w = jax.random.uniform(kw, (fan_in, fan_out), jnp.float32, -bound, bound)
        b = jax.random.uniform(kb, (1, fan_out), jnp.float32, -bound, bound)
        return w, b

    ks = jax.random.split(key, 5)
    p = {}
    p["w_stem"], p["b_stem"] = lin(ks[0], K_RAW, STEM_C)       # 3x3x3 conv (im2col layout)
    p["w_head"], p["b_head"] = lin(ks[1], STEM_C, IMG_FEATS)   # img branch head -> 48
    p["w_txt"], p["b_txt"] = lin(ks[2], TXT_DIM, TXT_FEATS)    # Linear(768, 24)
    p["w_f1"], p["b_f1"] = lin(ks[3], CAT_FEATS, HID_FEATS)    # Linear(72, 36)
    p["w_f2"], p["b_f2"] = lin(ks[4], HID_FEATS, NUM_CLASSES)  # Linear(36, 6)
    return p


if __name__ == "__main__":
    key = jax.random.PRNGKey(0)
    k_img, k_txt, k_par, k_img2 = jax.random.split(key, 4)
    x_img = jax.random.normal(k_img, (2, 3, 16, 16), jnp.float32)   # NCHW (PyTorch convention)
    x_txt = jax.random.normal(k_txt, (2, TXT_DIM), jnp.float32)
    params = init_params(k_par)
    prep = prepare_params(params)

    # Default (production) path: single big lane-dense tile, padded-column correction.
    out = jax.block_until_ready(hln_cat1_forward(prep, x_img, x_txt))
    ref = jax.block_until_ready(reference_forward(params, x_img, x_txt))
    assert out.shape == (2, NUM_CLASSES), out.shape
    err = float(jnp.max(jnp.abs(out - ref)))
    assert err < 1e-3, err

    # Small-tile path: exercises the multi-tile spatial accumulation (n_s > 1)
    # plus the last-tile padding correction.
    x_img2 = jax.random.normal(k_img2, (2, 3, 48, 48), jnp.float32)
    out2 = jax.block_until_ready(hln_cat1_forward(prep, x_img2, x_txt, spatial_tile=128))
    ref2 = jax.block_until_ready(reference_forward(params, x_img2, x_txt))
    err2 = float(jnp.max(jnp.abs(out2 - ref2)))
    assert err2 < 1e-3, err2

    print("KERNEL_OK")
</pallas_src>

<mosaic_0001>
module attributes {stable_mosaic.version = 11 : i64} {
  func.func @fused_kernel(%arg0: i32, %arg1: i32, %arg2: memref<1x32x128xbf16, #tpu.memory_space<vmem>>, %arg3: memref<24x32xbf16, #tpu.memory_space<vmem>>, %arg4: memref<24x1xf32, #tpu.memory_space<vmem>>, %arg5: memref<1x768x1xf32, #tpu.memory_space<vmem>>, %arg6: memref<36x24xf32, #tpu.memory_space<vmem>>, %arg7: memref<36x768xf32, #tpu.memory_space<vmem>>, %arg8: memref<36x1xf32, #tpu.memory_space<vmem>>, %arg9: memref<6x36xf32, #tpu.memory_space<vmem>>, %arg10: memref<6x1xf32, #tpu.memory_space<vmem>>, %arg11: memref<1x6x1xf32, #tpu.memory_space<vmem>>, %arg12: memref<24x1xf32, #tpu.memory_space<vmem>>) attributes {dimension_semantics = [#tpu.dimension_semantics<parallel>, #tpu.dimension_semantics<arbitrary>], iteration_bounds = array<i64: 2, 1>, scalar_prefetch = 0 : i64, scratch_operands = 1 : i64, tpu.core_type = #tpu.core_type<tc>, window_params = [{transform_indices = @transform_0, window_bounds = array<i64: 1, 32, 128>}, {pipeline_mode = #tpu.pipeline_mode<synchronous>, transform_indices = @transform_1, window_bounds = array<i64: 24, 32>}, {pipeline_mode = #tpu.pipeline_mode<synchronous>, transform_indices = @transform_2, window_bounds = array<i64: 24, 1>}, {transform_indices = @transform_3, window_bounds = array<i64: 1, 768, 1>}, {pipeline_mode = #tpu.pipeline_mode<synchronous>, transform_indices = @transform_4, window_bounds = array<i64: 36, 24>}, {pipeline_mode = #tpu.pipeline_mode<synchronous>, transform_indices = @transform_5, window_bounds = array<i64: 36, 768>}, {pipeline_mode = #tpu.pipeline_mode<synchronous>, transform_indices = @transform_6, window_bounds = array<i64: 36, 1>}, {pipeline_mode = #tpu.pipeline_mode<synchronous>, transform_indices = @transform_7, window_bounds = array<i64: 6, 36>}, {pipeline_mode = #tpu.pipeline_mode<synchronous>, transform_indices = @transform_8, window_bounds = array<i64: 6, 1>}, {transform_indices = @transform_9, window_bounds = array<i64: 1, 6, 1>}]} {
    %c0_i32 = arith.constant 0 : i32
    %0 = arith.cmpi eq, %arg1, %c0_i32 : i32
    %1 = arith.extui %0 : i1 to i32
    %c0_i32_0 = arith.constant 0 : i32
    %2 = arith.cmpi ne, %1, %c0_i32_0 : i32
    scf.if %2 {
      %cst_15 = arith.constant 0.000000e+00 : f32
      %20 = vector.broadcast %cst_15 : f32 to vector<24x1xf32>
      %c0_16 = arith.constant 0 : index
      %c0_17 = arith.constant 0 : index
      %21 = vector.load %arg12[%c0_16, %c0_17] : memref<24x1xf32, #tpu.memory_space<vmem>>, vector<24x1xf32>
      tpu.vector_store %arg12[%c0_16, %c0_17], %20 {strides = array<i32>} : memref<24x1xf32, #tpu.memory_space<vmem>>, vector<24x1xf32>,
    } else {
    }
    %c0 = arith.constant 0 : index
    %c0_1 = arith.constant 0 : index
    %3 = vector.load %arg3[%c0, %c0_1] : memref<24x32xbf16, #tpu.memory_space<vmem>>, vector<24x32xbf16>
    %c0_2 = arith.constant 0 : index
    %c0_3 = arith.constant 0 : index
    %c0_4 = arith.constant 0 : index
    %4 = vector.load %arg2[%c0_2, %c0_3, %c0_4] : memref<1x32x128xbf16, #tpu.memory_space<vmem>>, vector<1x32x128xbf16>
    %5 = vector.shape_cast %4 : vector<1x32x128xbf16> to vector<32x128xbf16>
    %cst = arith.constant dense<0.000000e+00> : vector<24x128xf32>
    %6 = tpu.matmul %3, %5, %cst {dimension_numbers = #tpu.dot_dimension_numbers<[1], [0], [0], [1], [0, 0, 1, 1], [], []>} : vector<24x32xbf16>, vector<32x128xbf16>, vector<24x128xf32> -> vector<24x128xf32>
    %c0_5 = arith.constant 0 : index
    %c0_6 = arith.constant 0 : index
    %7 = vector.load %arg4[%c0_5, %c0_6] : memref<24x1xf32, #tpu.memory_space<vmem>>, vector<24x1xf32>
    %8 = vector.broadcast %7 : vector<24x1xf32> to vector<24x128xf32>
    %9 = arith.addf %6, %8 : vector<24x128xf32>
    %cst_7 = arith.constant 0.000000e+00 : f32
    %10 = vector.broadcast %cst_7 : f32 to vector<24x128xf32>
    %11 = arith.maximumf %9, %10 : vector<24x128xf32>
    %c0_8 = arith.constant 0 : index
    %c0_9 = arith.constant 0 : index
    %12 = vector.load %arg12[%c0_8, %c0_9] : memref<24x1xf32, #tpu.memory_space<vmem>>, vector<24x1xf32>
    %cst_10 = arith.constant dense<0.000000e+00> : vector<24xf32>
    %13 = vector.multi_reduction <add>, %11, %cst_10 [1] : vector<24x128xf32> to vector<24xf32>
    %14 = vector.shape_cast %13 : vector<24xf32> to vector<24x1xf32>
    %15 = arith.addf %12, %14 : vector<24x1xf32>
    %c0_11 = arith.constant 0 : index
    %c0_12 = arith.constant 0 : index
    %16 = vector.load %arg12[%c0_11, %c0_12] : memref<24x1xf32, #tpu.memory_space<vmem>>, vector<24x1xf32>
    tpu.vector_store %arg12[%c0_11, %c0_12], %15 {strides = array<i32>} : memref<24x1xf32, #tpu.memory_space<vmem>>, vector<24x1xf32>,
    %c0_i32_13 = arith.constant 0 : i32
    %17 = arith.cmpi eq, %arg1, %c0_i32_13 : i32
    %18 = arith.extui %17 : i1 to i32
    %c0_i32_14 = arith.constant 0 : i32
    %19 = arith.cmpi ne, %18, %c0_i32_14 : i32
    scf.if %19 {
      %c0_15 = arith.constant 0 : index
      %c0_16 = arith.constant 0 : index
      %20 = vector.load %arg12[%c0_15, %c0_16] : memref<24x1xf32, #tpu.memory_space<vmem>>, vector<24x1xf32>
      %c0_17 = arith.constant 0 : index
      %c0_18 = arith.constant 0 : index
      %21 = vector.load %arg4[%c0_17, %c0_18] : memref<24x1xf32, #tpu.memory_space<vmem>>, vector<24x1xf32>
      %cst_19 = arith.constant 0.000000e+00 : f32
      %22 = vector.broadcast %cst_19 : f32 to vector<24x1xf32>
      %23 = arith.maximumf %21, %22 : vector<24x1xf32>
      %cst_20 = arith.constant 6.400000e+01 : f32
      %24 = vector.broadcast %cst_20 : f32 to vector<24x1xf32>
      %25 = arith.mulf %24, %23 : vector<24x1xf32>
      %26 = arith.subf %20, %25 : vector<24x1xf32>
      %cst_21 = arith.constant 1.562500e-02 : f32
      %27 = vector.broadcast %cst_21 : f32 to vector<24x1xf32>
      %28 = arith.mulf %26, %27 : vector<24x1xf32>
      %c0_22 = arith.constant 0 : index
      %c0_23 = arith.constant 0 : index
      %29 = vector.load %arg6[%c0_22, %c0_23] : memref<36x24xf32, #tpu.memory_space<vmem>>, vector<36x24xf32>
      %cst_24 = arith.constant dense<0.000000e+00> : vector<36x1xf32>
      %30 = tpu.matmul %29, %28, %cst_24 {dimension_numbers = #tpu.dot_dimension_numbers<[1], [0], [0], [1], [0, 0, 1, 1], [], []>} : vector<36x24xf32>, vector<24x1xf32>, vector<36x1xf32> -> vector<36x1xf32>
      %c0_25 = arith.constant 0 : index
      %c0_26 = arith.constant 0 : index
      %31 = vector.load %arg7[%c0_25, %c0_26] : memref<36x768xf32, #tpu.memory_space<vmem>>, vector<36x768xf32>
      %c0_27 = arith.constant 0 : index
      %c0_28 = arith.constant 0 : index
      %c0_29 = arith.constant 0 : index
      %32 = vector.load %arg5[%c0_27, %c0_28, %c0_29] : memref<1x768x1xf32, #tpu.memory_space<vmem>>, vector<1x768x1xf32>
      %33 = vector.shape_cast %32 : vector<1x768x1xf32> to vector<768x1xf32>
      %cst_30 = arith.constant dense<0.000000e+00> : vector<36x1xf32>
      %34 = tpu.matmul %31, %33, %cst_30 {dimension_numbers = #tpu.dot_dimension_numbers<[1], [0], [0], [1], [0, 0, 1, 1], [], []>} : vector<36x768xf32>, vector<768x1xf32>, vector<36x1xf32> -> vector<36x1xf32>
      %35 = arith.addf %30, %34 : vector<36x1xf32>
      %c0_31 = arith.constant 0 : index
      %c0_32 = arith.constant 0 : index
      %36 = vector.load %arg8[%c0_31, %c0_32] : memref<36x1xf32, #tpu.memory_space<vmem>>, vector<36x1xf32>
      %37 = arith.addf %35, %36 : vector<36x1xf32>
      %cst_33 = arith.constant 0.000000e+00 : f32
      %38 = vector.broadcast %cst_33 : f32 to vector<36x1xf32>
      %39 = arith.maximumf %37, %38 : vector<36x1xf32>
      %c0_34 = arith.constant 0 : index
      %c0_35 = arith.constant 0 : index
      %40 = vector.load %arg9[%c0_34, %c0_35] : memref<6x36xf32, #tpu.memory_space<vmem>>, vector<6x36xf32>
      %cst_36 = arith.constant dense<0.000000e+00> : vector<6x1xf32>
      %41 = tpu.matmul %40, %39, %cst_36 {dimension_numbers = #tpu.dot_dimension_numbers<[1], [0], [0], [1], [0, 0, 1, 1], [], []>} : vector<6x36xf32>, vector<36x1xf32>, vector<6x1xf32> -> vector<6x1xf32>
      %c0_37 = arith.constant 0 : index
      %c0_38 = arith.constant 0 : index
      %42 = vector.load %arg10[%c0_37, %c0_38] : memref<6x1xf32, #tpu.memory_space<vmem>>, vector<6x1xf32>
      %43 = arith.addf %41, %42 : vector<6x1xf32>
      %c0_39 = arith.constant 0 : index
      %c0_40 = arith.constant 0 : index
      %c0_41 = arith.constant 0 : index
      %44 = vector.load %arg11[%c0_39, %c0_40, %c0_41] : memref<1x6x1xf32, #tpu.memory_space<vmem>>, vector<1x6x1xf32>
      %45 = vector.shape_cast %44 : vector<1x6x1xf32> to vector<6x1xf32>
      %46 = vector.shape_cast %43 : vector<6x1xf32> to vector<1x6x1xf32>
      tpu.vector_store %arg11[%c0_39, %c0_40, %c0_41], %46 {strides = array<i32>} : memref<1x6x1xf32, #tpu.memory_space<vmem>>, vector<1x6x1xf32>,
    } else {
    }
    return
  }
  func.func @transform_0(%arg0: i32, %arg1: i32) -> (i32, i32, i32) {
    %c0_i32 = arith.constant 0 : i32
    %c0_i32_0 = arith.constant 0 : i32
    return %arg0, %c0_i32, %arg1 : i32, i32, i32
  }
  func.func @transform_1(%arg0: i32, %arg1: i32) -> (i32, i32) {
    %c0_i32 = arith.constant 0 : i32
    %c0_i32_0 = arith.constant 0 : i32
    %c0_i32_1 = arith.constant 0 : i32
    return %c0_i32, %c0_i32_0 : i32, i32
  }
  func.func @transform_2(%arg0: i32, %arg1: i32) -> (i32, i32) {
    %c0_i32 = arith.constant 0 : i32
    %c0_i32_0 = arith.constant 0 : i32
    %c0_i32_1 = arith.constant 0 : i32
    return %c0_i32, %c0_i32_0 : i32, i32
  }
  func.func @transform_3(%arg0: i32, %arg1: i32) -> (i32, i32, i32) {
    %c0_i32 = arith.constant 0 : i32
    %c0_i32_0 = arith.constant 0 : i32
    %c0_i32_1 = arith.constant 0 : i32
    return %arg0, %c0_i32, %c0_i32_0 : i32, i32, i32
  }
  func.func @transform_4(%arg0: i32, %arg1: i32) -> (i32, i32) {
    %c0_i32 = arith.constant 0 : i32
    %c0_i32_0 = arith.constant 0 : i32
    %c0_i32_1 = arith.constant 0 : i32
    return %c0_i32, %c0_i32_0 : i32, i32
  }
  func.func @transform_5(%arg0: i32, %arg1: i32) -> (i32, i32) {
    %c0_i32 = arith.constant 0 : i32
    %c0_i32_0 = arith.constant 0 : i32
    %c0_i32_1 = arith.constant 0 : i32
    return %c0_i32, %c0_i32_0 : i32, i32
  }
  func.func @transform_6(%arg0: i32, %arg1: i32) -> (i32, i32) {
    %c0_i32 = arith.constant 0 : i32
    %c0_i32_0 = arith.constant 0 : i32
    %c0_i32_1 = arith.constant 0 : i32
    return %c0_i32, %c0_i32_0 : i32, i32
  }
  func.func @transform_7(%arg0: i32, %arg1: i32) -> (i32, i32) {
    %c0_i32 = arith.constant 0 : i32
    %c0_i32_0 = arith.constant 0 : i32
    %c0_i32_1 = arith.constant 0 : i32
    return %c0_i32, %c0_i32_0 : i32, i32
  }
  func.func @transform_8(%arg0: i32, %arg1: i32) -> (i32, i32) {
    %c0_i32 = arith.constant 0 : i32
    %c0_i32_0 = arith.constant 0 : i32
    %c0_i32_1 = arith.constant 0 : i32
    return %c0_i32, %c0_i32_0 : i32, i32
  }
  func.func @transform_9(%arg0: i32, %arg1: i32) -> (i32, i32, i32) {
    %c0_i32 = arith.constant 0 : i32
    %c0_i32_0 = arith.constant 0 : i32
    %c0_i32_1 = arith.constant 0 : i32
    return %arg0, %c0_i32, %c0_i32_0 : i32, i32, i32
  }
}

</mosaic_0001>

<llo_original>
// kernel: tpu_custom_call.1
$region0: #{tpu_custom_call.1}
  #allocation0 [shape = 'u32[]', space=smem, size = 0x4, offset = 0x4, fixed_abs, tag = 'smem constant byte address 0x4 - core index']
  #allocation1 [shape = 'u32[144,128]{1,0:T(1,128)}', space=vmem, size = 0x12000, scoped, tag = 'internal scratch']
  #allocation2 [shape = 'f32[24,1]{1,0:T(8,128)}', space=vmem, size = 0x3000, scoped, tag = 'scratch operand']
  %s0 = inlined_call_operand.vmem [shape: bf16[2,32,128], index: 0, kind: input, shape index: {}]
  %s1 = inlined_call_operand.vmem [shape: bf16[24,32], index: 1, kind: input, shape index: {}]
  %s2 = inlined_call_operand.vmem [shape: f32[24,1], index: 2, kind: input, shape index: {}]
  %s3 = inlined_call_operand.vmem [shape: f32[2,768,1], index: 3, kind: input, shape index: {}]
  %s4 = inlined_call_operand.vmem [shape: f32[36,24], index: 4, kind: input, shape index: {}]
  %s5 = inlined_call_operand.vmem [shape: f32[36,768], index: 5, kind: input, shape index: {}]
  %s6 = inlined_call_operand.vmem [shape: f32[36,1], index: 6, kind: input, shape index: {}]
  %s7 = inlined_call_operand.vmem [shape: f32[6,36], index: 7, kind: input, shape index: {}]
  %s8 = inlined_call_operand.vmem [shape: f32[6,1], index: 8, kind: input, shape index: {}]
  %s9 = inlined_call_operand.vmem [shape: f32[2,6,1], index: 9, kind: output, shape index: {}]
  %s10 = sld [smem:[#allocation0]]
  $region77: #{tpu_custom_call.1} parent=0
    _
  %s12 = ssub.s32 1, %s10
  %s13 = scalar_select 0, %s12, %s10
  loop: start=0, step=1, limit=4
  $region2: #{tpu_custom_call.1} parent=0 // loop_pre_header
    _
  $region3: #{tpu_custom_call.1} parent=0 // loop_header
    %s15 = sphi 0, %s19
    %p16 = scmp.ge.s32.totalorder %s15, 4
    %s22 = sphi 0, %s34
    %s23 = sphi 0, %s30
    %s24 = sphi 0, %s22
    %s25 = sphi 0, %s23
    %s26 = sphi 0, %s24
    %s27 = sphi 0, %s25
    %s39 = sphi 0, %s41
    %s42 = sphi 0, %s39
    %s43 = sphi 0, %s42
    %s59 = sphi 0, %s43
    %s63 = sphi 0, %s63
    %s65 = sphi 0, %s63
    %s66 = sphi 0, %s65
    %s80 = sphi 0, %s66
    %s84 = sphi 0, %s84
    %s86 = sphi 0, %s84
    %s87 = sphi 0, %s86
    %s101 = sphi 0, %s87
    %s107 = sphi 0, %s109
    %s110 = sphi 0, %s107
    %s111 = sphi 0, %s110
    %s127 = sphi 0, %s111
    %s131 = sphi 0, %s131
    %s133 = sphi 0, %s131
    %s134 = sphi 0, %s133
    %s148 = sphi 0, %s134
    %s152 = sphi 0, %s152
    %s154 = sphi 0, %s152
    %s155 = sphi 0, %s154
    %s169 = sphi 0, %s155
    %s173 = sphi 0, %s173
    %s175 = sphi 0, %s173
    %s176 = sphi 0, %s175
    %s190 = sphi 0, %s176
    %s194 = sphi 0, %s194
    %s196 = sphi 0, %s194
    %s197 = sphi 0, %s196
    %s211 = sphi 0, %s197
    %s215 = sphi 0, %s215
    %s217 = sphi 0, %s215
    %s218 = sphi 0, %s217
    %s232 = sphi 0, %s218
    %s238 = sphi 0, %s240
    %s241 = sphi 0, %s238
    %s242 = sphi 0, %s241
    %s258 = sphi 0, %s242
  $region4: #{tpu_custom_call.1} parent=0 // loop_header_branch
    %18 = sbr.rel (%p16) target = $region8
  $region5: #{tpu_custom_call.1} parent=0 // loop_body
    %s20 = ssub.s32 %s15, 1
    %s21 = ssub.s32 %s15, 2
    %s28 = sadd.s32 1, %s23
    %p29 = scmp.ge.s32.totalorder %s28, 1
    %s30 = scalar_select %p29, 0, %s28
    %s31 = sadd.s32 1, %s22
    %s32 = scalar_select %p29, %s31, %s22
    %p33 = scmp.ge.s32.totalorder %s32, 2
    %s34 = scalar_select %p33, 0, %s32
    %s35 = ssub.s32 %s22, %s34
    %s36 = ssub.s32 %s23, %s30
    %s37 = sor.u32 %s35, %s36
    %p38 = scmp.eq.s32.totalorder %s37, 0
    %s40 = sadd.s32 %s39, 1
    %s41 = scalar_select %p38, %s39, %s40
    %p44 = pneg %p38
    %p45 = scmp.eq.s32.totalorder %s15, 1
    %p46 = por %p44, %p45
    %p47 = scmp.ne.s32.totalorder %s39, %s42
    %p48 = scmp.eq.s32.totalorder %s15, 0
    %p49 = por %p47, %p48
    %p50 = scmp.ne.s32.totalorder %s39, %s42
    %p51 = scmp.eq.s32.totalorder %s20, 1
    %p52 = por %p50, %p51
    %p53 = scmp.ne.s32.totalorder %s42, %s43
    %p54 = scmp.eq.s32.totalorder %s20, 0
    %p55 = por %p53, %p54
    %p56 = scmp.ne.s32.totalorder %s42, %s43
    %p57 = scmp.eq.s32.totalorder %s21, 1
    %p58 = por %p56, %p57
    %p60 = scmp.ne.s32.totalorder %s43, %s59
    %p61 = scmp.eq.s32.totalorder %s21, 0
    %p62 = por %p60, %p61
    %s64 = sadd.s32 %s63, 1
    %p67 = scmp.eq.s32.totalorder %s15, 1
    %p68 = scmp.ne.s32.totalorder %s63, %s65
    %p69 = scmp.eq.s32.totalorder %s15, 0
    %p70 = por %p68, %p69
    %p71 = scmp.ne.s32.totalorder %s63, %s65
    %p72 = scmp.eq.s32.totalorder %s20, 1
    %p73 = por %p71, %p72
    %p74 = scmp.ne.s32.totalorder %s65, %s66
    %p75 = scmp.eq.s32.totalorder %s20, 0
    %p76 = por %p74, %p75
    %p77 = scmp.ne.s32.totalorder %s65, %s66
    %p78 = scmp.eq.s32.totalorder %s21, 1
    %p79 = por %p77, %p78
    %p81 = scmp.ne.s32.totalorder %s66, %s80
    %p82 = scmp.eq.s32.totalorder %s21, 0
    %p83 = por %p81, %p82
    %s85 = sadd.s32 %s84, 1
    %p88 = scmp.eq.s32.totalorder %s15, 1
    %p89 = scmp.ne.s32.totalorder %s84, %s86
    %p90 = scmp.eq.s32.totalorder %s15, 0
    %p91 = por %p89, %p90
    %p92 = scmp.ne.s32.totalorder %s84, %s86
    %p93 = scmp.eq.s32.totalorder %s20, 1
    %p94 = por %p92, %p93
    %p95 = scmp.ne.s32.totalorder %s86, %s87
    %p96 = scmp.eq.s32.totalorder %s20, 0
    %p97 = por %p95, %p96
    %p98 = scmp.ne.s32.totalorder %s86, %s87
    %p99 = scmp.eq.s32.totalorder %s21, 1
    %p100 = por %p98, %p99
    %p102 = scmp.ne.s32.totalorder %s87, %s101
    %p103 = scmp.eq.s32.totalorder %s21, 0
    %p104 = por %p102, %p103
    %s105 = ssub.s32 %s22, %s34
    %p106 = scmp.eq.s32.totalorder %s105, 0
    %s108 = sadd.s32 %s107, 1
    %s109 = scalar_select %p106, %s107, %s108
    %p112 = pneg %p106
    %p113 = scmp.eq.s32.totalorder %s15, 1
    %p114 = por %p112, %p113
    %p115 = scmp.ne.s32.totalorder %s107, %s110
    %p116 = scmp.eq.s32.totalorder %s15, 0
    %p117 = por %p115, %p116
    %p118 = scmp.ne.s32.totalorder %s107, %s110
    %p119 = scmp.eq.s32.totalorder %s20, 1
    %p120 = por %p118, %p119
    %p121 = scmp.ne.s32.totalorder %s110, %s111
    %p122 = scmp.eq.s32.totalorder %s20, 0
    %p123 = por %p121, %p122
    %p124 = scmp.ne.s32.totalorder %s110, %s111
    %p125 = scmp.eq.s32.totalorder %s21, 1
    %p126 = por %p124, %p125
    %p128 = scmp.ne.s32.totalorder %s111, %s127
    %p129 = scmp.eq.s32.totalorder %s21, 0
    %p130 = por %p128, %p129
    %s132 = sadd.s32 %s131, 1
    %p135 = scmp.eq.s32.totalorder %s15, 1
    %p136 = scmp.ne.s32.totalorder %s131, %s133
    %p137 = scmp.eq.s32.totalorder %s15, 0
    %p138 = por %p136, %p137
    %p139 = scmp.ne.s32.totalorder %s131, %s133
    %p140 = scmp.eq.s32.totalorder %s20, 1
    %p141 = por %p139, %p140
    %p142 = scmp.ne.s32.totalorder %s133, %s134
    %p143 = scmp.eq.s32.totalorder %s20, 0
    %p144 = por %p142, %p143
    %p145 = scmp.ne.s32.totalorder %s133, %s134
    %p146 = scmp.eq.s32.totalorder %s21, 1
    %p147 = por %p145, %p146
    %p149 = scmp.ne.s32.totalorder %s134, %s148
    %p150 = scmp.eq.s32.totalorder %s21, 0
    %p151 = por %p149, %p150
    %s153 = sadd.s32 %s152, 1
    %p156 = scmp.eq.s32.totalorder %s15, 1
    %p157 = scmp.ne.s32.totalorder %s152, %s154
    %p158 = scmp.eq.s32.totalorder %s15, 0
    %p159 = por %p157, %p158
    %p160 = scmp.ne.s32.totalorder %s152, %s154
    %p161 = scmp.eq.s32.totalorder %s20, 1
    %p162 = por %p160, %p161
    %p163 = scmp.ne.s32.totalorder %s154, %s155
    %p164 = scmp.eq.s32.totalorder %s20, 0
    %p165 = por %p163, %p164
    %p166 = scmp.ne.s32.totalorder %s154, %s155
    %p167 = scmp.eq.s32.totalorder %s21, 1
    %p168 = por %p166, %p167
    %p170 = scmp.ne.s32.totalorder %s155, %s169
    %p171 = scmp.eq.s32.totalorder %s21, 0
    %p172 = por %p170, %p171
    %s174 = sadd.s32 %s173, 1
    %p177 = scmp.eq.s32.totalorder %s15, 1
    %p178 = scmp.ne.s32.totalorder %s173, %s175
    %p179 = scmp.eq.s32.totalorder %s15, 0
    %p180 = por %p178, %p179
    %p181 = scmp.ne.s32.totalorder %s173, %s175
    %p182 = scmp.eq.s32.totalorder %s20, 1
    %p183 = por %p181, %p182
    %p184 = scmp.ne.s32.totalorder %s175, %s176
    %p185 = scmp.eq.s32.totalorder %s20, 0
    %p186 = por %p184, %p185
    %p187 = scmp.ne.s32.totalorder %s175, %s176
    %p188 = scmp.eq.s32.totalorder %s21, 1
    %p189 = por %p187, %p188
    %p191 = scmp.ne.s32.totalorder %s176, %s190
    %p192 = scmp.eq.s32.totalorder %s21, 0
    %p193 = por %p191, %p192
    %s195 = sadd.s32 %s194, 1
    %p198 = scmp.eq.s32.totalorder %s15, 1
    %p199 = scmp.ne.s32.totalorder %s194, %s196
    %p200 = scmp.eq.s32.totalorder %s15, 0
    %p201 = por %p199, %p200
    %p202 = scmp.ne.s32.totalorder %s194, %s196
    %p203 = scmp.eq.s32.totalorder %s20, 1
    %p204 = por %p202, %p203
    %p205 = scmp.ne.s32.totalorder %s196, %s197
    %p206 = scmp.eq.s32.totalorder %s20, 0
    %p207 = por %p205, %p206
    %p208 = scmp.ne.s32.totalorder %s196, %s197
    %p209 = scmp.eq.s32.totalorder %s21, 1
    %p210 = por %p208, %p209
    %p212 = scmp.ne.s32.totalorder %s197, %s211
    %p213 = scmp.eq.s32.totalorder %s21, 0
    %p214 = por %p212, %p213
    %s216 = sadd.s32 %s215, 1
    %p219 = scmp.eq.s32.totalorder %s15, 1
    %p220 = scmp.ne.s32.totalorder %s215, %s217
    %p221 = scmp.eq.s32.totalorder %s15, 0
    %p222 = por %p220, %p221
    %p223 = scmp.ne.s32.totalorder %s215, %s217
    %p224 = scmp.eq.s32.totalorder %s20, 1
    %p225 = por %p223, %p224
    %p226 = scmp.ne.s32.totalorder %s217, %s218
    %p227 = scmp.eq.s32.totalorder %s20, 0
    %p228 = por %p226, %p227
    %p229 = scmp.ne.s32.totalorder %s217, %s218
    %p230 = scmp.eq.s32.totalorder %s21, 1
    %p231 = por %p229, %p230
    %p233 = scmp.ne.s32.totalorder %s218, %s232
    %p234 = scmp.eq.s32.totalorder %s21, 0
    %p235 = por %p233, %p234
    %s236 = ssub.s32 %s22, %s34
    %p237 = scmp.eq.s32.totalorder %s236, 0
    %s239 = sadd.s32 %s238, 1
    %s240 = scalar_select %p237, %s238, %s239
    %p243 = pneg %p237
    %p244 = scmp.eq.s32.totalorder %s15, 1
    %p245 = por %p243, %p244
    %p246 = scmp.ne.s32.totalorder %s238, %s241
    %p247 = scmp.eq.s32.totalorder %s15, 0
    %p248 = por %p246, %p247
    %p249 = scmp.ne.s32.totalorder %s238, %s241
    %p250 = scmp.eq.s32.totalorder %s20, 1
    %p251 = por %p249, %p250
    %p252 = scmp.ne.s32.totalorder %s241, %s242
    %p253 = scmp.eq.s32.totalorder %s20, 0
    %p254 = por %p252, %p253
    %p255 = scmp.ne.s32.totalorder %s241, %s242
    %p256 = scmp.eq.s32.totalorder %s21, 1
    %p257 = por %p255, %p256
    %p259 = scmp.ne.s32.totalorder %s242, %s258
    %p260 = scmp.eq.s32.totalorder %s21, 0
    %p261 = por %p259, %p260
    %p262 = scmp.le.s32.totalorder 1, %s15
    %p263 = scmp.lt.s32.totalorder %s15, 3
    %p264 = pnand %p262, %p263
    %p265 = pneg %p264
    // Predicated region
    $region9: #{tpu_custom_call.1} parent=5 // pred_check
      _
    $region10: #{tpu_custom_call.1} parent=5 // pred_check_branch
      %267 = sbr.rel (%p264) target = $region12
    $region11: #{tpu_custom_call.1} parent=5 // pred_region
      %s268 = ssub.s32 %s15, 1
      // Predicated region
      $region13: #{tpu_custom_call.1} parent=11 // pred_check
        %p269 = pneg %p76
      $region14: #{tpu_custom_call.1} parent=11 // pred_check_branch
        %271 = sbr.rel (%p269) target = $region16
      $region15: #{tpu_custom_call.1} parent=11 // pred_region
        _
      $region16: #{tpu_custom_call.1} parent=11 // pred_fallthru
        _
      // Predicated region
      $region17: #{tpu_custom_call.1} parent=11 // pred_check
        %p272 = pneg %p97
      $region18: #{tpu_custom_call.1} parent=11 // pred_check_branch
        %274 = sbr.rel (%p272) target = $region20
      $region19: #{tpu_custom_call.1} parent=11 // pred_region
        _
      $region20: #{tpu_custom_call.1} parent=11 // pred_fallthru
        _
      // Predicated region
      $region21: #{tpu_custom_call.1} parent=11 // pred_check
        %p275 = pneg %p144
      $region22: #{tpu_custom_call.1} parent=11 // pred_check_branch
        %277 = sbr.rel (%p275) target = $region24
      $region23: #{tpu_custom_call.1} parent=11 // pred_region
        _
      $region24: #{tpu_custom_call.1} parent=11 // pred_fallthru
        _
      // Predicated region
      $region25: #{tpu_custom_call.1} parent=11 // pred_check
        %p278 = pneg %p165
      $region26: #{tpu_custom_call.1} parent=11 // pred_check_branch
        %280 = sbr.rel (%p278) target = $region28
      $region27: #{tpu_custom_call.1} parent=11 // pred_region
        _
      $region28: #{tpu_custom_call.1} parent=11 // pred_fallthru
        _
      // Predicated region
      $region29: #{tpu_custom_call.1} parent=11 // pred_check
        %p281 = pneg %p186
      $region30: #{tpu_custom_call.1} parent=11 // pred_check_branch
        %283 = sbr.rel (%p281) target = $region32
      $region31: #{tpu_custom_call.1} parent=11 // pred_region
        _
      $region32: #{tpu_custom_call.1} parent=11 // pred_fallthru
        _
      // Predicated region
      $region33: #{tpu_custom_call.1} parent=11 // pred_check
        %p284 = pneg %p207
      $region34: #{tpu_custom_call.1} parent=11 // pred_check_branch
        %286 = sbr.rel (%p284) target = $region36
      $region35: #{tpu_custom_call.1} parent=11 // pred_region
        _
      $region36: #{tpu_custom_call.1} parent=11 // pred_fallthru
        _
      // Predicated region
      $region37: #{tpu_custom_call.1} parent=11 // pred_check
        %p287 = pneg %p228
      $region38: #{tpu_custom_call.1} parent=11 // pred_check_branch
        %289 = sbr.rel (%p287) target = $region40
      $region39: #{tpu_custom_call.1} parent=11 // pred_region
        _
      $region40: #{tpu_custom_call.1} parent=11 // pred_fallthru
        _
    $region12: #{tpu_custom_call.1} parent=5 // pred_fallthru
      _
    %p290 = scmp.lt.s32.totalorder %s15, 2
    // Predicated region
    $region41: #{tpu_custom_call.1} parent=5 // pred_check
      %p291 = pneg %p290
    $region42: #{tpu_custom_call.1} parent=5 // pred_check_branch
      %293 = sbr.rel (%p291) target = $region44
    $region43: #{tpu_custom_call.1} parent=5 // pred_region
      // Predicated region
      $region45: #{tpu_custom_call.1} parent=43 // pred_check
        %p294 = pneg %p49
      $region46: #{tpu_custom_call.1} parent=43 // pred_check_branch
        %296 = sbr.rel (%p294) target = $region48
      $region47: #{tpu_custom_call.1} parent=43 // pred_region
        %p297 = scmp.lt.s32.totalorder %s22, 1
        %s298 = scalar_select %p297, %s22, 1
        %p299 = scmp.lt.s32.totalorder %s23, 0
        %s300 = scalar_select %p299, %s23, 0
        %s301 = smul.addr %s298, 4
        %s302 = sadd.s32 %s300, %s301
        %s303 = smul.addr %s302, 4
        %s304 = scalar_lea.vmem %s0, %s303
      $region48: #{tpu_custom_call.1} parent=43 // pred_fallthru
        _
      // Predicated region
      $region49: #{tpu_custom_call.1} parent=43 // pred_check
        %p305 = pneg %p117
      $region50: #{tpu_custom_call.1} parent=43 // pred_check_branch
        %307 = sbr.rel (%p305) target = $region52
      $region51: #{tpu_custom_call.1} parent=43 // pred_region
        %p308 = scmp.lt.s32.totalorder %s22, 1
        %s309 = scalar_select %p308, %s22, 1
        %s310 = smul.addr %s309, 96
        %s311 = smul.addr %s310, 8
        %s312 = scalar_lea.vmem %s3, %s311
      $region52: #{tpu_custom_call.1} parent=43 // pred_fallthru
        _
    $region44: #{tpu_custom_call.1} parent=5 // pred_fallthru
      _
    %p313 = scmp.le.s32.totalorder 1, %s15
    %p314 = scmp.lt.s32.totalorder %s15, 3
    %p315 = pnand %p313, %p314
    %p316 = pneg %p315
    // Predicated region
    $region53: #{tpu_custom_call.1} parent=5 // pred_check
      _
    $region54: #{tpu_custom_call.1} parent=5 // pred_check_branch
      %318 = sbr.rel (%p315) target = $region56
    $region55: #{tpu_custom_call.1} parent=5 // pred_region
      %s319 = ssub.s32 %s15, 1
      %p320 = scmp.lt.s32.totalorder %s24, 1
      %s321 = scalar_select %p320, %s24, 1
      %p322 = scmp.lt.s32.totalorder %s25, 0
      %s323 = scalar_select %p322, %s25, 0
      %s324 = smul.addr %s321, 4
      %s325 = sadd.s32 %s323, %s324
      %s326 = smul.addr %s325, 4
      %s327 = scalar_lea.vmem %s0, %s326
      %p328 = pneg %p55
      %p329 = pneg %p52
      %p330 = pneg %p76
      %p331 = pneg %p73
      %p332 = pneg %p97
      %p333 = pneg %p94
      %p334 = scmp.lt.s32.totalorder %s24, 1
      %s335 = scalar_select %p334, %s24, 1
      %s336 = smul.addr %s335, 96
      %s337 = smul.addr %s336, 8
      %s338 = scalar_lea.vmem %s3, %s337
      %p339 = pneg %p123
      %p340 = pneg %p120
      %p341 = pneg %p144
      %p342 = pneg %p141
      %p343 = pneg %p165
      %p344 = pneg %p162
      %p345 = pneg %p186
      %p346 = pneg %p183
      %p347 = pneg %p207
      %p348 = pneg %p204
      %p349 = pneg %p228
      %p350 = pneg %p225
      %p351 = pneg %p254
      %p352 = pneg %p251
      %p353 = scmp.lt.s32.totalorder %s24, 1
      %s354 = scalar_select %p353, %s24, 1
      %s355 = smul.addr %s354, 8
      %s356 = scalar_lea.vmem %s9, %s355
      %p357 = scmp.lt.s32.totalorder %s24, 1
      %s358 = scalar_select %p357, %s24, 1
      %p359 = scmp.lt.s32.totalorder %s25, 0
      %s360 = scalar_select %p359, %s25, 0
      %s361 = smul.addr %s358, 4
      %s362 = sadd.s32 %s360, %s361
      %s363 = smul.addr %s362, 4
      %s364 = scalar_lea.vmem %s0, %s363
      %p365 = scmp.lt.s32.totalorder %s24, 1
      %s366 = scalar_select %p365, %s24, 1
      %s367 = smul.addr %s366, 96
      %s368 = smul.addr %s367, 8
      %s369 = scalar_lea.vmem %s3, %s368
      %p370 = scmp.lt.s32.totalorder %s24, 1
      %s371 = scalar_select %p370, %s24, 1
      %s372 = smul.addr %s371, 8
      %s373 = scalar_lea.vmem %s9, %s372
      %p375 = scmp.eq.s32.totalorder %s25, 0
      // Predicated region
      $region57: #{tpu_custom_call.1} parent=55 // pred_check
        %p376 = pneg %p375
      $region58: #{tpu_custom_call.1} parent=55 // pred_check_branch
        %378 = sbr.rel (%p376) target = $region60
      $region59: #{tpu_custom_call.1} parent=55 // pred_region
        %vm379 = vcmask 7168
        %380 = vst.msk [vmem:[#allocation2] sm:$0xff] %vm379, 0.0
        %381 = vst.msk [vmem:[#allocation2 + $0x8] sm:$0xff] %vm379, 0.0
        %382 = vst.msk [vmem:[#allocation2 + $0x10] sm:$0xff] %vm379, 0.0
      $region60: #{tpu_custom_call.1} parent=55 // pred_fallthru
        _
      %v383 = vld [vmem:[%s1] sm:$0xf]
      %v384 = vld [vmem:[%s1 + $0x4] sm:$0xf]
      %v385 = vld [vmem:[%s1 + $0x8] sm:$0xf]
      %v386 = vld [vmem:[%s364] sm:$0xf]
      %v387 = vld [vmem:[%s364 + $0x4] sm:$0xf]
      %v388 = vld [vmem:[%s364 + $0x8] sm:$0xf]
      %v389 = vld [vmem:[%s364 + $0xc] sm:$0xf]
      %v390 = vld [vmem:[%s2] sm:$0xff]
      %v391 = vld [vmem:[%s2 + $0x8] sm:$0xff]
      %v392 = vld [vmem:[%s2 + $0x10] sm:$0xff]
      %394 = vset.pattern.permute.xlu0 0
      %395 = vperm.xlu0 %394, %v390
      %v396 = vpop.permute.xlu0 %395
      %399 = vset.pattern.permute.xlu0 0
      %400 = vperm.xlu0 %399, %v391
      %v401 = vpop.permute.xlu0 %400
      %404 = vset.pattern.permute.xlu0 0
      %405 = vperm.xlu0 %404, %v392
      %v406 = vpop.permute.xlu0 %405
      %v411 = vunpack.c.l.b16 %v383
      %v412 = vunpack.c.l.b16 %v384
      %v413 = vunpack.c.l.b16 %v385
      %v414 = vpack.c.b16 %v412, %v411
      %v415 = vpack.c.b16 %v413, %v413
      %v420 = vunpack.c.l.b16 %v386
      %v421 = vunpack.c.l.b16 %v387
      %v422 = vunpack.c.l.b16 %v388
      %v423 = vunpack.c.l.b16 %v389
      %v424 = vpack.c.b16 %v421, %v420
      %v425 = vpack.c.b16 %v423, %v422
      %vm428 = vcmask 261120
      %v430 = vsel %vm428, %v414, 0
      %v433 = vsel %vm428, %v415, 0
      %435 = vmatprep.subr.bf16.mxu0 0
      %436 = vmatpush1.bf16.msra.mxu0 0
      %437 = vmatprep.subr.bf16.mxu0 0
      %438 = vmatpush1.bf16.msra.mxu0 0
      %439 = vmatprep.subr.bf16.mxu0 0
      %440 = vmatpush1.bf16.msra.mxu0 0
      %441 = vmatprep.subr.bf16.mxu0 0
      %442 = vmatpush1.bf16.msra.mxu0 0
      %443 = vmatprep.subr.bf16.mxu0 0
      %444 = vmatpush1.bf16.msra.mxu0 0
      %445 = vmatprep.subr.bf16.mxu0 0
      %446 = vmatpush1.bf16.msra.mxu0 0
      %447 = vmatprep.subr.bf16.mxu0 0
      %448 = vmatpush1.bf16.msra.mxu0 %v425
      %449 = vmatprep.subr.bf16.mxu0 0
      %450 = vmatpush1.bf16.msra.mxu0 %v424
      %451 = vmatprep.subr.bf16.mxu0 0
      %452 = vmatpush2.bf16.msra.mxu0 0
      %453 = vmatprep.subr.bf16.mxu0 0
      %454 = vmatpush2.bf16.msra.mxu0 0
      %455 = vmatprep.subr.bf16.mxu0 0
      %456 = vmatpush2.bf16.msra.mxu0 0
      %457 = vmatprep.subr.bf16.mxu0 0
      %458 = vmatpush2.bf16.msra.mxu0 0
      %459 = vmatprep.subr.bf16.mxu0 0
      %460 = vmatpush2.bf16.msra.mxu0 0
      %461 = vmatprep.subr.bf16.mxu0 0
      %462 = vmatpush2.bf16.msra.mxu0 0
      %463 = vmatprep.subr.bf16.mxu0 0
      %464 = vmatpush2.bf16.msra.mxu0 0
      %465 = vmatprep.subr.bf16.mxu0 0
      %466 = vmatpush2.bf16.msra.mxu0 0
      %467 = vmatprep.mubr.bf16.mxu0 0
      %468 = vmatmul.mubr.bf16.gmra.mxu0 %v430
      %v469 = vpop.f32.mrf.mxu0
      %v470 = vadd.f32 %v396, %v469
      %v471 = vpop.f32.mrf.mxu0
      %v472 = vpop.f32.mrf.mxu0
      %v473 = vadd.f32 %v401, %v472
      %v474 = vpop.f32.mrf.mxu0
      %475 = vmatprep.mubr.bf16.mxu0 0
      %476 = vmatmul.mubr.bf16.gmra.mxu0 %v433
      %v477 = vpop.f32.mrf.mxu0
      %v478 = vadd.f32 %v406, %v477
      %v479 = vpop.f32.mrf.mxu0
      %v480 = vpop.f32.mrf.mxu0
      %v481 = vpop.f32.mrf.mxu0
      %482 = vdwg.mxu0
      %v483 = vmax.f32 %v470, 0.0
      %v484 = vmax.f32 %v473, 0.0
      %v485 = vmax.f32 %v478, 0.0
      %v486 = vld [vmem:[#allocation2] sm:$0xff]
      %v487 = vld [vmem:[#allocation2 + $0x8] sm:$0xff]
      %v488 = vld [vmem:[#allocation2 + $0x10] sm:$0xff]
      %489 = vadd.xlane.f32.xlu0 %v483
      %v490 = vpop.xlane.xlu0 %489
      %491 = vadd.xlane.f32.xlu0 %v484
      %v492 = vpop.xlane.xlu0 %491
      %493 = vadd.xlane.f32.xlu0 %v485
      %v494 = vpop.xlane.xlu0 %493
      %v495 = vadd.f32 %v486, %v490
      %v496 = vadd.f32 %v487, %v492
      %v497 = vadd.f32 %v488, %v494
      %vm498 = vcmask 7168
      %499 = vst.msk [vmem:[#allocation2] sm:$0xff] %vm498, %v495
      %500 = vst.msk [vmem:[#allocation2 + $0x8] sm:$0xff] %vm498, %v496
      %501 = vst.msk [vmem:[#allocation2 + $0x10] sm:$0xff] %vm498, %v497
      // Predicated region
      $region61: #{tpu_custom_call.1} parent=55 // pred_check
        %p502 = pneg %p375
      $region62: #{tpu_custom_call.1} parent=55 // pred_check_branch
        %504 = sbr.rel (%p502) target = $region64
      $region63: #{tpu_custom_call.1} parent=55 // pred_region
        %v505 = vld [vmem:[#allocation2] sm:$0xff]
        %v506 = vld [vmem:[#allocation2 + $0x8] sm:$0xff]
        %v507 = vld [vmem:[#allocation2 + $0x10] sm:$0xff]
        %v508 = vld [vmem:[%s2] sm:$0xff]
        %v509 = vld [vmem:[%s2 + $0x8] sm:$0xff]
        %v510 = vld [vmem:[%s2 + $0x10] sm:$0xff]
        %v511 = vmax.f32 %v508, 0.0
        %v512 = vmax.f32 %v509, 0.0
        %v513 = vmax.f32 %v510, 0.0
        %v514 = vmul.f32 %v511, 64.0
        %v515 = vmul.f32 %v512, 64.0
        %v516 = vmul.f32 %v513, 64.0
        %v517 = vsub.f32 %v505, %v514
        %v518 = vsub.f32 %v506, %v515
        %v519 = vsub.f32 %v507, %v516
        %v520 = vmul.f32 %v517, 0.015625
        %v521 = vmul.f32 %v518, 0.015625
        %v522 = vmul.f32 %v519, 0.015625
        %v523 = vld [vmem:[%s4] sm:$0xff]
        %v524 = vld [vmem:[%s4 + $0x8] sm:$0xff]
        %v525 = vld [vmem:[%s4 + $0x10] sm:$0xff]
        %v526 = vld [vmem:[%s4 + $0x18] sm:$0xff]
        %v527 = vld [vmem:[%s4 + $0x20] sm:$0xf]
        %v528 = vld [vmem:[%s5] sm:$0xff]
        %v529 = vld [vmem:[%s5 + $0x8] sm:$0xff]
        %v530 = vld [vmem:[%s5 + $0x10] sm:$0xff]
        %v531 = vld [vmem:[%s5 + $0x18] sm:$0xff]
        %v532 = vld [vmem:[%s5 + $0x20] sm:$0xff]
        %v533 = vld [vmem:[%s5 + $0x28] sm:$0xff]
        %v534 = vld [vmem:[%s5 + $0x30] sm:$0xff]
        %v535 = vld [vmem:[%s5 + $0x38] sm:$0xff]
        %v536 = vld [vmem:[%s5 + $0x40] sm:$0xff]
        %v537 = vld [vmem:[%s5 + $0x48] sm:$0xff]
        %v538 = vld [vmem:[%s5 + $0x50] sm:$0xff]
        %v539 = vld [vmem:[%s5 + $0x58] sm:$0xff]
        %v540 = vld [vmem:[%s5 + $0x60] sm:$0xff]
        %v541 = vld [vmem:[%s5 + $0x68] sm:$0xff]
        %v542 = vld [vmem:[%s5 + $0x70] sm:$0xff]
        %v543 = vld [vmem:[%s5 + $0x78] sm:$0xff]
        %v544 = vld [vmem:[%s5 + $0x80] sm:$0xff]
        %v545 = vld [vmem:[%s5 + $0x88] sm:$0xff]
        %v546 = vld [vmem:[%s5 + $0x90] sm:$0xff]
        %v547 = vld [vmem:[%s5 + $0x98] sm:$0xff]
        %v548 = vld [vmem:[%s5 + $0xa0] sm:$0xff]
        %v549 = vld [vmem:[%s5 + $0xa8] sm:$0xff]
        %v550 = vld [vmem:[%s5 + $0xb0] sm:$0xff]
        %v551 = vld [vmem:[%s5 + $0xb8] sm:$0xff]
        %v552 = vld [vmem:[%s5 + $0xc0] sm:$0xf]
        %v553 = vld [vmem:[%s5 + $0xc8] sm:$0xf]
        %v554 = vld [vmem:[%s5 + $0xd0] sm:$0xf]
        %v555 = vld [vmem:[%s5 + $0xd8] sm:$0xf]
        %v556 = vld [vmem:[%s5 + $0xe0] sm:$0xf]
        %v557 = vld [vmem:[%s5 + $0xe8] sm:$0xf]
        %v558 = vld [vmem:[%s369] sm:$0xff]
        %v559 = vld [vmem:[%s369 + $0x8] sm:$0xff]
        %v560 = vld [vmem:[%s369 + $0x10] sm:$0xff]
        %v561 = vld [vmem:[%s369 + $0x18] sm:$0xff]
        %v562 = vld [vmem:[%s369 + $0x20] sm:$0xff]
        %v563 = vld [vmem:[%s369 + $0x28] sm:$0xff]
        %v564 = vld [vmem:[%s369 + $0x30] sm:$0xff]
        %v565 = vld [vmem:[%s369 + $0x38] sm:$0xff]
        %v566 = vld [vmem:[%s369 + $0x40] sm:$0xff]
        %v567 = vld [vmem:[%s369 + $0x48] sm:$0xff]
        %v568 = vld [vmem:[%s369 + $0x50] sm:$0xff]
        %v569 = vld [vmem:[%s369 + $0x58] sm:$0xff]
        %v570 = vld [vmem:[%s369 + $0x60] sm:$0xff]
        %v571 = vld [vmem:[%s369 + $0x68] sm:$0xff]
        %v572 = vld [vmem:[%s369 + $0x70] sm:$0xff]
        %v573 = vld [vmem:[%s369 + $0x78] sm:$0xff]
        %v574 = vld [vmem:[%s369 + $0x80] sm:$0xff]
        %v575 = vld [vmem:[%s369 + $0x88] sm:$0xff]
        %v576 = vld [vmem:[%s369 + $0x90] sm:$0xff]
        %v577 = vld [vmem:[%s369 + $0x98] sm:$0xff]
        %v578 = vld [vmem:[%s369 + $0xa0] sm:$0xff]
        %v579 = vld [vmem:[%s369 + $0xa8] sm:$0xff]
        %v580 = vld [vmem:[%s369 + $0xb0] sm:$0xff]
        %v581 = vld [vmem:[%s369 + $0xb8] sm:$0xff]
        %v582 = vld [vmem:[%s369 + $0xc0] sm:$0xff]
        %v583 = vld [vmem:[%s369 + $0xc8] sm:$0xff]
        %v584 = vld [vmem:[%s369 + $0xd0] sm:$0xff]
        %v585 = vld [vmem:[%s369 + $0xd8] sm:$0xff]
        %v586 = vld [vmem:[%s369 + $0xe0] sm:$0xff]
        %v587 = vld [vmem:[%s369 + $0xe8] sm:$0xff]
        %v588 = vld [vmem:[%s369 + $0xf0] sm:$0xff]
        %v589 = vld [vmem:[%s369 + $0xf8] sm:$0xff]
        %v590 = vld [vmem:[%s369 + $0x100] sm:$0xff]
        %v591 = vld [vmem:[%s369 + $0x108] sm:$0xff]
        %v592 = vld [vmem:[%s369 + $0x110] sm:$0xff]
        %v593 = vld [vmem:[%s369 + $0x118] sm:$0xff]
        %v594 = vld [vmem:[%s369 + $0x120] sm:$0xff]
        %v595 = vld [vmem:[%s369 + $0x128] sm:$0xff]
        %v596 = vld [vmem:[%s369 + $0x130] sm:$0xff]
        %v597 = vld [vmem:[%s369 + $0x138] sm:$0xff]
        %v598 = vld [vmem:[%s369 + $0x140] sm:$0xff]
        %v599 = vld [vmem:[%s369 + $0x148] sm:$0xff]
        %v600 = vld [vmem:[%s369 + $0x150] sm:$0xff]
        %v601 = vld [vmem:[%s369 + $0x158] sm:$0xff]
        %v602 = vld [vmem:[%s369 + $0x160] sm:$0xff]
        %v603 = vld [vmem:[%s369 + $0x168] sm:$0xff]
        %v604 = vld [vmem:[%s369 + $0x170] sm:$0xff]
        %v605 = vld [vmem:[%s369 + $0x178] sm:$0xff]
        %v606 = vld [vmem:[%s369 + $0x180] sm:$0xff]
        %v607 = vld [vmem:[%s369 + $0x188] sm:$0xff]
        %v608 = vld [vmem:[%s369 + $0x190] sm:$0xff]
        %v609 = vld [vmem:[%s369 + $0x198] sm:$0xff]
        %v610 = vld [vmem:[%s369 + $0x1a0] sm:$0xff]
        %v611 = vld [vmem:[%s369 + $0x1a8] sm:$0xff]
        %v612 = vld [vmem:[%s369 + $0x1b0] sm:$0xff]
        %v613 = vld [vmem:[%s369 + $0x1b8] sm:$0xff]
        %v614 = vld [vmem:[%s369 + $0x1c0] sm:$0xff]
        %v615 = vld [vmem:[%s369 + $0x1c8] sm:$0xff]
        %v616 = vld [vmem:[%s369 + $0x1d0] sm:$0xff]
        %v617 = vld [vmem:[%s369 + $0x1d8] sm:$0xff]
        %v618 = vld [vmem:[%s369 + $0x1e0] sm:$0xff]
        %v619 = vld [vmem:[%s369 + $0x1e8] sm:$0xff]
        %v620 = vld [vmem:[%s369 + $0x1f0] sm:$0xff]
        %v621 = vld [vmem:[%s369 + $0x1f8] sm:$0xff]
        %v622 = vld [vmem:[%s369 + $0x200] sm:$0xff]
        %v623 = vld [vmem:[%s369 + $0x208] sm:$0xff]
        %v624 = vld [vmem:[%s369 + $0x210] sm:$0xff]
        %v625 = vld [vmem:[%s369 + $0x218] sm:$0xff]
        %v626 = vld [vmem:[%s369 + $0x220] sm:$0xff]
        %v627 = vld [vmem:[%s369 + $0x228] sm:$0xff]
        %v628 = vld [vmem:[%s369 + $0x230] sm:$0xff]
        %v629 = vld [vmem:[%s369 + $0x238] sm:$0xff]
        %v630 = vld [vmem:[%s369 + $0x240] sm:$0xff]
        %v631 = vld [vmem:[%s369 + $0x248] sm:$0xff]
        %v632 = vld [vmem:[%s369 + $0x250] sm:$0xff]
        %v633 = vld [vmem:[%s369 + $0x258] sm:$0xff]
        %v634 = vld [vmem:[%s369 + $0x260] sm:$0xff]
        %v635 = vld [vmem:[%s369 + $0x268] sm:$0xff]
        %v636 = vld [vmem:[%s369 + $0x270] sm:$0xff]
        %v637 = vld [vmem:[%s369 + $0x278] sm:$0xff]
        %v638 = vld [vmem:[%s369 + $0x280] sm:$0xff]
        %v639 = vld [vmem:[%s369 + $0x288] sm:$0xff]
        %v640 = vld [vmem:[%s369 + $0x290] sm:$0xff]
        %v641 = vld [vmem:[%s369 + $0x298] sm:$0xff]
        %v642 = vld [vmem:[%s369 + $0x2a0] sm:$0xff]
        %v643 = vld [vmem:[%s369 + $0x2a8] sm:$0xff]
        %v644 = vld [vmem:[%s369 + $0x2b0] sm:$0xff]
        %v645 = vld [vmem:[%s369 + $0x2b8] sm:$0xff]
        %v646 = vld [vmem:[%s369 + $0x2c0] sm:$0xff]
        %v647 = vld [vmem:[%s369 + $0x2c8] sm:$0xff]
        %v648 = vld [vmem:[%s369 + $0x2d0] sm:$0xff]
        %v649 = vld [vmem:[%s369 + $0x2d8] sm:$0xff]
        %v650 = vld [vmem:[%s369 + $0x2e0] sm:$0xff]
        %v651 = vld [vmem:[%s369 + $0x2e8] sm:$0xff]
        %v652 = vld [vmem:[%s369 + $0x2f0] sm:$0xff]
        %v653 = vld [vmem:[%s369 + $0x2f8] sm:$0xff]
        %654 = vmatprep.subr.mxu0 0.0
        %655 = vmatpush1.msra.mxu0 %v573
        %656 = vmatprep.subr.mxu0 0.0
        %657 = vmatpush1.msra.mxu0 %v572
        %658 = vmatprep.subr.mxu0 0.0
        %659 = vmatpush1.msra.mxu0 %v571
        %660 = vmatprep.subr.mxu0 0.0
        %661 = vmatpush1.msra.mxu0 %v570
        %662 = vmatprep.subr.mxu0 0.0
        %663 = vmatpush1.msra.mxu0 %v569
        %664 = vmatprep.subr.mxu0 0.0
        %665 = vmatpush1.msra.mxu0 %v568
        %666 = vmatprep.subr.mxu0 0.0
        %667 = vmatpush1.msra.mxu0 %v567
        %668 = vmatprep.subr.mxu0 0.0
        %669 = vmatpush1.msra.mxu0 %v566
        %670 = vmatprep.subr.mxu0 0.0
        %671 = vmatpush1.msra.mxu0 %v565
        %672 = vmatprep.subr.mxu0 0.0
        %673 = vmatpush1.msra.mxu0 %v564
        %674 = vmatprep.subr.mxu0 0.0
        %675 = vmatpush1.msra.mxu0 %v563
        %676 = vmatprep.subr.mxu0 0.0
        %677 = vmatpush1.msra.mxu0 %v562
        %678 = vmatprep.subr.mxu0 0.0
        %679 = vmatpush1.msra.mxu0 %v561
        %680 = vmatprep.subr.mxu0 0.0
        %681 = vmatpush1.msra.mxu0 %v560
        %682 = vmatprep.subr.mxu0 0.0
        %683 = vmatpush1.msra.mxu0 %v559
        %684 = vmatprep.subr.mxu0 0.0
        %685 = vmatpush1.msra.mxu0 %v558
        %686 = vmatprep.subr.mxu0 0.0
        %687 = vmatpush2.msra.mxu0 %v589
        %688 = vmatprep.subr.mxu0 0.0
        %689 = vmatpush2.msra.mxu0 %v588
        %690 = vmatprep.subr.mxu0 0.0
        %691 = vmatpush2.msra.mxu0 %v587
        %692 = vmatprep.subr.mxu0 0.0
        %693 = vmatpush2.msra.mxu0 %v586
        %694 = vmatprep.subr.mxu0 0.0
        %695 = vmatpush2.msra.mxu0 %v585
        %696 = vmatprep.subr.mxu0 0.0
        %697 = vmatpush2.msra.mxu0 %v584
        %698 = vmatprep.subr.mxu0 0.0
        %699 = vmatpush2.msra.mxu0 %v583
        %700 = vmatprep.subr.mxu0 0.0
        %701 = vmatpush2.msra.mxu0 %v582
        %702 = vmatprep.subr.mxu0 0.0
        %703 = vmatpush2.msra.mxu0 %v581
        %704 = vmatprep.subr.mxu0 0.0
        %705 = vmatpush2.msra.mxu0 %v580
        %706 = vmatprep.subr.mxu0 0.0
        %707 = vmatpush2.msra.mxu0 %v579
        %708 = vmatprep.subr.mxu0 0.0
        %709 = vmatpush2.msra.mxu0 %v578
        %710 = vmatprep.subr.mxu0 0.0
        %711 = vmatpush2.msra.mxu0 %v577
        %712 = vmatprep.subr.mxu0 0.0
        %713 = vmatpush2.msra.mxu0 %v576
        %714 = vmatprep.subr.mxu0 0.0
        %715 = vmatpush2.msra.mxu0 %v575
        %716 = vmatprep.subr.mxu0 0.0
        %717 = vmatpush2.msra.mxu0 %v574
        %718 = vmatprep.mubr.f32.mxu0 %v529
        %719 = vmatmul.mubr.f32.gmra.mxu0 %v528
        %v720 = vpop.f32.mrf.mxu0
        %v721 = vadd.f32 0.0, %v720
        %v722 = vpop.f32.mrf.mxu0
        %723 = vmatprep.mubr.f32.mxu0 %v535
        %724 = vmatmul.mubr.f32.gmra.mxu0 %v534
        %v725 = vpop.f32.mrf.mxu0
        %v726 = vadd.f32 0.0, %v725
        %v727 = vpop.f32.mrf.mxu0
        %728 = vmatprep.mubr.f32.mxu0 %v541
        %729 = vmatmul.mubr.f32.gmra.mxu0 %v540
        %v730 = vpop.f32.mrf.mxu0
        %v731 = vadd.f32 0.0, %v730
        %v732 = vpop.f32.mrf.mxu0
        %733 = vmatprep.mubr.f32.mxu0 %v547
        %734 = vmatmul.mubr.f32.gmra.mxu0 %v546
        %v735 = vpop.f32.mrf.mxu0
        %v736 = vadd.f32 0.0, %v735
        %v737 = vpop.f32.mrf.mxu0
        %738 = vmatprep.mubr.f32.mxu0 %v553
        %739 = vmatmul.mubr.f32.gmra.mxu0 %v552
        %v740 = vpop.f32.mrf.mxu0
        %v741 = vadd.f32 0.0, %v740
        %v742 = vpop.f32.mrf.mxu0
        %743 = vdwg.mxu0
        %744 = vmatprep.subr.mxu0 0.0
        %745 = vmatpush1.msra.mxu0 %v605
        %746 = vmatprep.subr.mxu0 0.0
        %747 = vmatpush1.msra.mxu0 %v604
        %748 = vmatprep.subr.mxu0 0.0
        %749 = vmatpush1.msra.mxu0 %v603
        %750 = vmatprep.subr.mxu0 0.0
        %751 = vmatpush1.msra.mxu0 %v602
        %752 = vmatprep.subr.mxu0 0.0
        %753 = vmatpush1.msra.mxu0 %v601
        %754 = vmatprep.subr.mxu0 0.0
        %755 = vmatpush1.msra.mxu0 %v600
        %756 = vmatprep.subr.mxu0 0.0
        %757 = vmatpush1.msra.mxu0 %v599
        %758 = vmatprep.subr.mxu0 0.0
        %759 = vmatpush1.msra.mxu0 %v598
        %760 = vmatprep.subr.mxu0 0.0
        %761 = vmatpush1.msra.mxu0 %v597
        %762 = vmatprep.subr.mxu0 0.0
        %763 = vmatpush1.msra.mxu0 %v596
        %764 = vmatprep.subr.mxu0 0.0
        %765 = vmatpush1.msra.mxu0 %v595
        %766 = vmatprep.subr.mxu0 0.0
        %767 = vmatpush1.msra.mxu0 %v594
        %768 = vmatprep.subr.mxu0 0.0
        %769 = vmatpush1.msra.mxu0 %v593
        %770 = vmatprep.subr.mxu0 0.0
        %771 = vmatpush1.msra.mxu0 %v592
        %772 = vmatprep.subr.mxu0 0.0
        %773 = vmatpush1.msra.mxu0 %v591
        %774 = vmatprep.subr.mxu0 0.0
        %775 = vmatpush1.msra.mxu0 %v590
        %776 = vmatprep.subr.mxu0 0.0
        %777 = vmatpush2.msra.mxu0 %v621
        %778 = vmatprep.subr.mxu0 0.0
        %779 = vmatpush2.msra.mxu0 %v620
        %780 = vmatprep.subr.mxu0 0.0
        %781 = vmatpush2.msra.mxu0 %v619
        %782 = vmatprep.subr.mxu0 0.0
        %783 = vmatpush2.msra.mxu0 %v618
        %784 = vmatprep.subr.mxu0 0.0
        %785 = vmatpush2.msra.mxu0 %v617
        %786 = vmatprep.subr.mxu0 0.0
        %787 = vmatpush2.msra.mxu0 %v616
        %788 = vmatprep.subr.mxu0 0.0
        %789 = vmatpush2.msra.mxu0 %v615
        %790 = vmatprep.subr.mxu0 0.0
        %791 = vmatpush2.msra.mxu0 %v614
        %792 = vmatprep.subr.mxu0 0.0
        %793 = vmatpush2.msra.mxu0 %v613
        %794 = vmatprep.subr.mxu0 0.0
        %795 = vmatpush2.msra.mxu0 %v612
        %796 = vmatprep.subr.mxu0 0.0
        %797 = vmatpush2.msra.mxu0 %v611
        %798 = vmatprep.subr.mxu0 0.0
        %799 = vmatpush2.msra.mxu0 %v610
        %800 = vmatprep.subr.mxu0 0.0
        %801 = vmatpush2.msra.mxu0 %v609
        %802 = vmatprep.subr.mxu0 0.0
        %803 = vmatpush2.msra.mxu0 %v608
        %804 = vmatprep.subr.mxu0 0.0
        %805 = vmatpush2.msra.mxu0 %v607
        %806 = vmatprep.subr.mxu0 0.0
        %807 = vmatpush2.msra.mxu0 %v606
        %808 = vmatprep.mubr.f32.mxu0 %v531
        %809 = vmatmul.mubr.f32.gmra.mxu0 %v530
        %v810 = vpop.f32.mrf.mxu0
        %v811 = vadd.f32 %v721, %v810
        %v812 = vpop.f32.mrf.mxu0
        %813 = vmatprep.mubr.f32.mxu0 %v537
        %814 = vmatmul.mubr.f32.gmra.mxu0 %v536
        %v815 = vpop.f32.mrf.mxu0
        %v816 = vadd.f32 %v726, %v815
        %v817 = vpop.f32.mrf.mxu0
        %818 = vmatprep.mubr.f32.mxu0 %v543
        %819 = vmatmul.mubr.f32.gmra.mxu0 %v542
        %v820 = vpop.f32.mrf.mxu0
        %v821 = vadd.f32 %v731, %v820
        %v822 = vpop.f32.mrf.mxu0
        %823 = vmatprep.mubr.f32.mxu0 %v549
        %824 = vmatmul.mubr.f32.gmra.mxu0 %v548
        %v825 = vpop.f32.mrf.mxu0
        %v826 = vadd.f32 %v736, %v825
        %v827 = vpop.f32.mrf.mxu0
        %828 = vmatprep.mubr.f32.mxu0 %v555
        %829 = vmatmul.mubr.f32.gmra.mxu0 %v554
        %v830 = vpop.f32.mrf.mxu0
        %v831 = vadd.f32 %v741, %v830
        %v832 = vpop.f32.mrf.mxu0
        %833 = vdwg.mxu0
        %834 = vmatprep.subr.mxu0 0.0
        %835 = vmatpush1.msra.mxu0 %v637
        %836 = vmatprep.subr.mxu0 0.0
        %837 = vmatpush1.msra.mxu0 %v636
        %838 = vmatprep.subr.mxu0 0.0
        %839 = vmatpush1.msra.mxu0 %v635
        %840 = vmatprep.subr.mxu0 0.0
        %841 = vmatpush1.msra.mxu0 %v634
        %842 = vmatprep.subr.mxu0 0.0
        %843 = vmatpush1.msra.mxu0 %v633
        %844 = vmatprep.subr.mxu0 0.0
        %845 = vmatpush1.msra.mxu0 %v632
        %846 = vmatprep.subr.mxu0 0.0
        %847 = vmatpush1.msra.mxu0 %v631
        %848 = vmatprep.subr.mxu0 0.0
        %849 = vmatpush1.msra.mxu0 %v630
        %850 = vmatprep.subr.mxu0 0.0
        %851 = vmatpush1.msra.mxu0 %v629
        %852 = vmatprep.subr.mxu0 0.0
        %853 = vmatpush1.msra.mxu0 %v628
        %854 = vmatprep.subr.mxu0 0.0
        %855 = vmatpush1.msra.mxu0 %v627
        %856 = vmatprep.subr.mxu0 0.0
        %857 = vmatpush1.msra.mxu0 %v626
        %858 = vmatprep.subr.mxu0 0.0
        %859 = vmatpush1.msra.mxu0 %v625
        %860 = vmatprep.subr.mxu0 0.0
        %861 = vmatpush1.msra.mxu0 %v624
        %862 = vmatprep.subr.mxu0 0.0
        %863 = vmatpush1.msra.mxu0 %v623
        %864 = vmatprep.subr.mxu0 0.0
        %865 = vmatpush1.msra.mxu0 %v622
        %866 = vmatprep.subr.mxu0 0.0
        %867 = vmatpush2.msra.mxu0 %v653
        %868 = vmatprep.subr.mxu0 0.0
        %869 = vmatpush2.msra.mxu0 %v652
        %870 = vmatprep.subr.mxu0 0.0
        %871 = vmatpush2.msra.mxu0 %v651
        %872 = vmatprep.subr.mxu0 0.0
        %873 = vmatpush2.msra.mxu0 %v650
        %874 = vmatprep.subr.mxu0 0.0
        %875 = vmatpush2.msra.mxu0 %v649
        %876 = vmatprep.subr.mxu0 0.0
        %877 = vmatpush2.msra.mxu0 %v648
        %878 = vmatprep.subr.mxu0 0.0
        %879 = vmatpush2.msra.mxu0 %v647
        %880 = vmatprep.subr.mxu0 0.0
        %881 = vmatpush2.msra.mxu0 %v646
        %882 = vmatprep.subr.mxu0 0.0
        %883 = vmatpush2.msra.mxu0 %v645
        %884 = vmatprep.subr.mxu0 0.0
        %885 = vmatpush2.msra.mxu0 %v644
        %886 = vmatprep.subr.mxu0 0.0
        %887 = vmatpush2.msra.mxu0 %v643
        %888 = vmatprep.subr.mxu0 0.0
        %889 = vmatpush2.msra.mxu0 %v642
        %890 = vmatprep.subr.mxu0 0.0
        %891 = vmatpush2.msra.mxu0 %v641
        %892 = vmatprep.subr.mxu0 0.0
        %893 = vmatpush2.msra.mxu0 %v640
        %894 = vmatprep.subr.mxu0 0.0
        %895 = vmatpush2.msra.mxu0 %v639
        %896 = vmatprep.subr.mxu0 0.0
        %897 = vmatpush2.msra.mxu0 %v638
        %898 = vmatprep.mubr.f32.mxu0 %v533
        %899 = vmatmul.mubr.f32.gmra.mxu0 %v532
        %v900 = vpop.f32.mrf.mxu0
        %v901 = vadd.f32 %v811, %v900
        %v902 = vpop.f32.mrf.mxu0
        %903 = vmatprep.mubr.f32.mxu0 %v539
        %904 = vmatmul.mubr.f32.gmra.mxu0 %v538
        %v905 = vpop.f32.mrf.mxu0
        %v906 = vadd.f32 %v816, %v905
        %v907 = vpop.f32.mrf.mxu0
        %908 = vmatprep.mubr.f32.mxu0 %v545
        %909 = vmatmul.mubr.f32.gmra.mxu0 %v544
        %v910 = vpop.f32.mrf.mxu0
        %v911 = vadd.f32 %v821, %v910
        %v912 = vpop.f32.mrf.mxu0
        %913 = vmatprep.mubr.f32.mxu0 %v551
        %914 = vmatmul.mubr.f32.gmra.mxu0 %v550
        %v915 = vpop.f32.mrf.mxu0
        %v916 = vadd.f32 %v826, %v915
        %v917 = vpop.f32.mrf.mxu0
        %918 = vmatprep.mubr.f32.mxu0 %v557
        %919 = vmatmul.mubr.f32.gmra.mxu0 %v556
        %v920 = vpop.f32.mrf.mxu0
        %v921 = vadd.f32 %v831, %v920
        %v922 = vpop.f32.mrf.mxu0
        %923 = vdwg.mxu0
        %vm924 = vcmask 195584
        %v926 = vsel %vm924, %v523, 0
        %v929 = vsel %vm924, %v524, 0
        %v932 = vsel %vm924, %v525, 0
        %v935 = vsel %vm924, %v526, 0
        %v938 = vsel %vm924, %v527, 0
        %940 = vmatprep.subr.mxu0 0.0
        %941 = vmatpush1.msra.mxu0 0.0
        %942 = vmatprep.subr.mxu0 0.0
        %943 = vmatpush1.msra.mxu0 0.0
        %944 = vmatprep.subr.mxu0 0.0
        %945 = vmatpush1.msra.mxu0 0.0
        %946 = vmatprep.subr.mxu0 0.0
        %947 = vmatpush1.msra.mxu0 0.0
        %948 = vmatprep.subr.mxu0 0.0
        %949 = vmatpush1.msra.mxu0 0.0
        %950 = vmatprep.subr.mxu0 0.0
        %951 = vmatpush1.msra.mxu0 0.0
        %952 = vmatprep.subr.mxu0 0.0
        %953 = vmatpush1.msra.mxu0 0.0
        %954 = vmatprep.subr.mxu0 0.0
        %955 = vmatpush1.msra.mxu0 0.0
        %956 = vmatprep.subr.mxu0 0.0
        %957 = vmatpush1.msra.mxu0 0.0
        %958 = vmatprep.subr.mxu0 0.0
        %959 = vmatpush1.msra.mxu0 0.0
        %960 = vmatprep.subr.mxu0 0.0
        %961 = vmatpush1.msra.mxu0 0.0
        %962 = vmatprep.subr.mxu0 0.0
        %963 = vmatpush1.msra.mxu0 0.0
        %964 = vmatprep.subr.mxu0 0.0
        %965 = vmatpush1.msra.mxu0 0.0
        %966 = vmatprep.subr.mxu0 0.0
        %967 = vmatpush1.msra.mxu0 %v522
        %968 = vmatprep.subr.mxu0 0.0
        %969 = vmatpush1.msra.mxu0 %v521
        %970 = vmatprep.subr.mxu0 0.0
        %971 = vmatpush1.msra.mxu0 %v520
        %972 = vmatprep.subr.mxu0 0.0
        %973 = vmatpush2.msra.mxu0 0.0
        %974 = vmatprep.subr.mxu0 0.0
        %975 = vmatpush2.msra.mxu0 0.0
        %976 = vmatprep.subr.mxu0 0.0
        %977 = vmatpush2.msra.mxu0 0.0
        %978 = vmatprep.subr.mxu0 0.0
        %979 = vmatpush2.msra.mxu0 0.0
        %980 = vmatprep.subr.mxu0 0.0
        %981 = vmatpush2.msra.mxu0 0.0
        %982 = vmatprep.subr.mxu0 0.0
        %983 = vmatpush2.msra.mxu0 0.0
        %984 = vmatprep.subr.mxu0 0.0
        %985 = vmatpush2.msra.mxu0 0.0
        %986 = vmatprep.subr.mxu0 0.0
        %987 = vmatpush2.msra.mxu0 0.0
        %988 = vmatprep.subr.mxu0 0.0
        %989 = vmatpush2.msra.mxu0 0.0
        %990 = vmatprep.subr.mxu0 0.0
        %991 = vmatpush2.msra.mxu0 0.0
        %992 = vmatprep.subr.mxu0 0.0
        %993 = vmatpush2.msra.mxu0 0.0
        %994 = vmatprep.subr.mxu0 0.0
        %995 = vmatpush2.msra.mxu0 0.0
        %996 = vmatprep.subr.mxu0 0.0
        %997 = vmatpush2.msra.mxu0 0.0
        %998 = vmatprep.subr.mxu0 0.0
        %999 = vmatpush2.msra.mxu0 0.0
        %1000 = vmatprep.subr.mxu0 0.0
        %1001 = vmatpush2.msra.mxu0 0.0
        %1002 = vmatprep.subr.mxu0 0.0
        %1003 = vmatpush2.msra.mxu0 0.0
        %1004 = vmatprep.mubr.f32.mxu0 0.0
        %1005 = vmatmul.mubr.f32.gmra.mxu0 %v926
        %v1006 = vpop.f32.mrf.mxu0
        %v1007 = vadd.f32 %v901, %v1006
        %v1008 = vpop.f32.mrf.mxu0
        %1009 = vmatprep.mubr.f32.mxu0 0.0
        %1010 = vmatmul.mubr.f32.gmra.mxu0 %v929
        %v1011 = vpop.f32.mrf.mxu0
        %v1012 = vadd.f32 %v906, %v1011
        %v1013 = vpop.f32.mrf.mxu0
        %1014 = vmatprep.mubr.f32.mxu0 0.0
        %1015 = vmatmul.mubr.f32.gmra.mxu0 %v932
        %v1016 = vpop.f32.mrf.mxu0
        %v1017 = vadd.f32 %v911, %v1016
        %v1018 = vpop.f32.mrf.mxu0
        %1019 = vmatprep.mubr.f32.mxu0 0.0
        %1020 = vmatmul.mubr.f32.gmra.mxu0 %v935
        %v1021 = vpop.f32.mrf.mxu0
        %v1022 = vadd.f32 %v916, %v1021
        %v1023 = vpop.f32.mrf.mxu0
        %1024 = vmatprep.mubr.f32.mxu0 0.0
        %1025 = vmatmul.mubr.f32.gmra.mxu0 %v938
        %v1026 = vpop.f32.mrf.mxu0
        %v1027 = vadd.f32 %v921, %v1026
        %v1028 = vpop.f32.mrf.mxu0
        %1029 = vdwg.mxu0
        %v1030 = vld [vmem:[%s6] sm:$0xff]
        %v1031 = vld [vmem:[%s6 + $0x8] sm:$0xff]
        %v1032 = vld [vmem:[%s6 + $0x10] sm:$0xff]
        %v1033 = vld [vmem:[%s6 + $0x18] sm:$0xff]
        %v1034 = vld [vmem:[%s6 + $0x20] sm:$0xf]
        %v1035 = vadd.f32 %v1007, %v1030
        %v1036 = vadd.f32 %v1012, %v1031
        %v1037 = vadd.f32 %v1017, %v1032
        %v1038 = vadd.f32 %v1022, %v1033
        %v1039 = vadd.f32 %v1027, %v1034
        %v1040 = vmax.f32 %v1035, 0.0
        %v1041 = vmax.f32 %v1036, 0.0
        %v1042 = vmax.f32 %v1037, 0.0
        %v1043 = vmax.f32 %v1038, 0.0
        %v1044 = vmax.f32 %v1039, 0.0
        %v1045 = vld [vmem:[%s7] sm:$0x3f]
        %v1046 = vld [vmem:[%s8] sm:$0x3f]
        %vm1047 = vcmask 293888
        %v1049 = vsel %vm1047, %v1045, 0
        %vm1051 = vcmask 1043456
        %v1053 = vsel %vm1051, %v1044, 0
        %1055 = vmatprep.subr.mxu0 0.0
        %1056 = vmatpush1.msra.mxu0 0.0
        %1057 = vmatprep.subr.mxu0 0.0
        %1058 = vmatpush1.msra.mxu0 0.0
        %1059 = vmatprep.subr.mxu0 0.0
        %1060 = vmatpush1.msra.mxu0 0.0
        %1061 = vmatprep.subr.mxu0 0.0
        %1062 = vmatpush1.msra.mxu0 0.0
        %1063 = vmatprep.subr.mxu0 0.0
        %1064 = vmatpush1.msra.mxu0 0.0
        %1065 = vmatprep.subr.mxu0 0.0
        %1066 = vmatpush1.msra.mxu0 0.0
        %1067 = vmatprep.subr.mxu0 0.0
        %1068 = vmatpush1.msra.mxu0 0.0
        %1069 = vmatprep.subr.mxu0 0.0
        %1070 = vmatpush1.msra.mxu0 0.0
        %1071 = vmatprep.subr.mxu0 0.0
        %1072 = vmatpush1.msra.mxu0 0.0
        %1073 = vmatprep.subr.mxu0 0.0
        %1074 = vmatpush1.msra.mxu0 0.0
        %1075 = vmatprep.subr.mxu0 0.0
        %1076 = vmatpush1.msra.mxu0 0.0
        %1077 = vmatprep.subr.mxu0 0.0
        %1078 = vmatpush1.msra.mxu0 %v1053
        %1079 = vmatprep.subr.mxu0 0.0
        %1080 = vmatpush1.msra.mxu0 %v1043
        %1081 = vmatprep.subr.mxu0 0.0
        %1082 = vmatpush1.msra.mxu0 %v1042
        %1083 = vmatprep.subr.mxu0 0.0
        %1084 = vmatpush1.msra.mxu0 %v1041
        %1085 = vmatprep.subr.mxu0 0.0
        %1086 = vmatpush1.msra.mxu0 %v1040
        %1087 = vmatprep.subr.mxu0 0.0
        %1088 = vmatpush2.msra.mxu0 0.0
        %1089 = vmatprep.subr.mxu0 0.0
        %1090 = vmatpush2.msra.mxu0 0.0
        %1091 = vmatprep.subr.mxu0 0.0
        %1092 = vmatpush2.msra.mxu0 0.0
        %1093 = vmatprep.subr.mxu0 0.0
        %1094 = vmatpush2.msra.mxu0 0.0
        %1095 = vmatprep.subr.mxu0 0.0
        %1096 = vmatpush2.msra.mxu0 0.0
        %1097 = vmatprep.subr.mxu0 0.0
        %1098 = vmatpush2.msra.mxu0 0.0
        %1099 = vmatprep.subr.mxu0 0.0
        %1100 = vmatpush2.msra.mxu0 0.0
        %1101 = vmatprep.subr.mxu0 0.0
        %1102 = vmatpush2.msra.mxu0 0.0
        %1103 = vmatprep.subr.mxu0 0.0
        %1104 = vmatpush2.msra.mxu0 0.0
        %1105 = vmatprep.subr.mxu0 0.0
        %1106 = vmatpush2.msra.mxu0 0.0
        %1107 = vmatprep.subr.mxu0 0.0
        %1108 = vmatpush2.msra.mxu0 0.0
        %1109 = vmatprep.subr.mxu0 0.0
        %1110 = vmatpush2.msra.mxu0 0.0
        %1111 = vmatprep.subr.mxu0 0.0
        %1112 = vmatpush2.msra.mxu0 0.0
        %1113 = vmatprep.subr.mxu0 0.0
        %1114 = vmatpush2.msra.mxu0 0.0
        %1115 = vmatprep.subr.mxu0 0.0
        %1116 = vmatpush2.msra.mxu0 0.0
        %1117 = vmatprep.subr.mxu0 0.0
        %1118 = vmatpush2.msra.mxu0 0.0
        %1119 = vmatprep.mubr.f32.mxu0 0.0
        %1120 = vmatmul.mubr.f32.gmra.mxu0 %v1049
        %v1121 = vpop.f32.mrf.mxu0
        %v1122 = vadd.f32 %v1046, %v1121
        %v1123 = vpop.f32.mrf.mxu0
        %1124 = vdwg.mxu0
        %vm1125 = vcmask 5120
        %1126 = vst.msk [vmem:[%s373] sm:$0x3f] %vm1125, %v1122
      $region64: #{tpu_custom_call.1} parent=55 // pred_fallthru
        _
      %p1127 = scmp.lt.s32.totalorder %s24, 1
      %s1128 = scalar_select %p1127, %s24, 1
      %s1129 = smul.addr %s1128, 8
      %s1130 = scalar_lea.vmem %s9, %s1129
      // Predicated region
      $region65: #{tpu_custom_call.1} parent=55 // pred_check
        %p1131 = pneg %p251
      $region66: #{tpu_custom_call.1} parent=55 // pred_check_branch
        %1133 = sbr.rel (%p1131) target = $region68
      $region67: #{tpu_custom_call.1} parent=55 // pred_region
        _
      $region68: #{tpu_custom_call.1} parent=55 // pred_fallthru
        _
    $region56: #{tpu_custom_call.1} parent=5 // pred_fallthru
      _
    %p1134 = scmp.le.s32.totalorder 2, %s15
    // Predicated region
    $region69: #{tpu_custom_call.1} parent=5 // pred_check
      %p1135 = pneg %p1134
    $region70: #{tpu_custom_call.1} parent=5 // pred_check_branch
      %1137 = sbr.rel (%p1135) target = $region72
    $region71: #{tpu_custom_call.1} parent=5 // pred_region
      %s1138 = ssub.s32 %s15, 2
      // Predicated region
      $region73: #{tpu_custom_call.1} parent=71 // pred_check
        %p1139 = pneg %p257
      $region74: #{tpu_custom_call.1} parent=71 // pred_check_branch
        %1141 = sbr.rel (%p1139) target = $region76
      $region75: #{tpu_custom_call.1} parent=71 // pred_region
        %p1142 = scmp.lt.s32.totalorder %s26, 1
        %s1143 = scalar_select %p1142, %s26, 1
        %s1144 = smul.addr %s1143, 8
        %s1145 = scalar_lea.vmem %s9, %s1144
      $region76: #{tpu_custom_call.1} parent=71 // pred_fallthru
        _
    $region72: #{tpu_custom_call.1} parent=5 // pred_fallthru
      _
  $region6: #{tpu_custom_call.1} parent=0 // loop_footer
    %s19 = sadd.s32 1, %s15
  $region7: #{tpu_custom_call.1} parent=0 // loop_footer_branch
    %14 = sbr.rel target = $region3
  $region8: #{tpu_custom_call.1} parent=0 // loop_exit
    _

</llo_original>
